<compile_context>
chip_gen: v6e
topology: v6e:2x2x1
jax: 0.10.0
libtpu: 0.0.40
codegen_flags: <defaults>
</compile_context>

<pallas_src>
import functools

import numpy as np
import jax
import jax.numpy as jnp
from jax.experimental import pallas as pl
from jax.experimental.pallas import tpu as pltpu

N_CLASSES = 16   # matches one_hot(true, 16) hard-coded in the PyTorch module
SMOOTH = 1e-6
# Spatial (lane) tile: multiple of 128.  16384 keeps the per-step VMEM budget
# (double-buffered (C,TS) pred + labels + a few (C,TS) f32 temps, ~8-12 MiB)
# under the 32 MiB default scoped VMEM on every generation (v5e/v6e/v7x)
# while amortizing the ~0.35 us per-grid-step overhead over ~1 MiB of HBM
# reads per step.
DEFAULT_MAX_TILE_S = 16384


def _round_up(x, m):
    return ((x + m - 1) // m) * m


def _dice_stats_kernel(pred_ref, labels_ref, out_ref, *, s_actual, padded):
    # pred_ref:   (1, C, TS) logits tile (native dtype) for one batch element
    # labels_ref: (1, 1, TS) int32 voxel labels tile
    # out_ref:    (1, 3, C) f32 accumulator: rows = [inter, pred_sum, target_sum]
    s_idx = pl.program_id(1)

    @pl.when(s_idx == 0)
    def _():
        out_ref[...] = jnp.zeros_like(out_ref)

    x = pred_ref[0].astype(jnp.float32)                   # (C, TS)
    C, TS = x.shape

    # Softmax over the channel (sublane) axis.  exp on EUP, max/sum on XLU,
    # approx reciprocal on EUP (separate bundle slots from the VPU work).
    m = jnp.max(x, axis=0, keepdims=True)                 # (1, TS)
    e = jnp.exp(x - m)                                     # (C, TS)
    denom = jnp.sum(e, axis=0, keepdims=True)              # (1, TS)
    sm = e * pl.reciprocal(denom, approx=True)             # (C, TS)

    # One-hot of labels as a boolean mask (never materialized as f32 in HBM).
    labels = labels_ref[0]                                  # (1, TS) int32
    class_ids = jax.lax.broadcasted_iota(jnp.int32, (C, TS), 0)
    hit = labels == class_ids                               # (C, TS) bool

    if padded:
        # Mask lanes beyond the true spatial extent (only the last tile has
        # any); padded columns would otherwise corrupt pred_sum/target_sum.
        lane_ids = jax.lax.broadcasted_iota(jnp.int32, (1, TS), 1)
        valid = (s_idx * TS + lane_ids) < s_actual           # (1, TS) bool
        hit = jnp.logical_and(hit, valid)
        sm = jnp.where(valid, sm, 0.0)

    inter_p = jnp.sum(jnp.where(hit, sm, 0.0), axis=1)       # (C,)
    pred_p = jnp.sum(sm, axis=1)                             # (C,)
    tgt_p = jnp.sum(hit.astype(jnp.float32), axis=1)         # (C,)

    # VMEM read-modify-write of the resident output block; the HBM store only
    # happens once per batch element, after the last spatial tile.
    out_ref[0, 0, :] += inter_p
    out_ref[0, 1, :] += pred_p
    out_ref[0, 2, :] += tgt_p


def combo_loss_wbce_dice(pred, true, weight, alpha=0.5, smooth=SMOOTH,
                         max_tile_s=DEFAULT_MAX_TILE_S):
    """pred: (B, C, D, H, W) logits; true: (B, D, H, W) int labels in [0, C).

    Returns the scalar dice loss matching ComboLoss_wbce_dice.forward.
    `weight` / `alpha` are accepted for API parity but unused by the PyTorch
    forward (class_weights is computed then never used; BCE branch not called).
    """
    B, C = int(pred.shape[0]), int(pred.shape[1])
    assert C == len(weight), "shape is not mapping"
    assert C == N_CLASSES, "one_hot(true, 16) requires 16 channels"
    S = int(np.prod(pred.shape[2:]))

    ts = min(_round_up(S, 128), max_tile_s)
    s_pad = _round_up(S, ts)
    n_s = s_pad // ts

    # Keep pred in its native dtype (bf16 inputs halve the HBM read traffic
    # that bounds this kernel); the f32 cast happens per tile in the kernel.
    pred_r = pred.reshape(B, C, S)
    labels_r = true.reshape(B, 1, S).astype(jnp.int32)
    if s_pad != S:
        pred_r = jnp.pad(pred_r, ((0, 0), (0, 0), (0, s_pad - S)))
        labels_r = jnp.pad(labels_r, ((0, 0), (0, 0), (0, s_pad - S)))

    # TODO(synk): if the real workload keeps S tiny (a few hundred voxels),
    # block several batch elements per grid step to amortize per-step overhead.
    kernel = functools.partial(_dice_stats_kernel, s_actual=S,
                               padded=(s_pad != S))

    stats = pl.pallas_call(
        kernel,
        out_shape=jax.ShapeDtypeStruct((B, 3, C), jnp.float32),
        grid_spec=pltpu.PrefetchScalarGridSpec(
            num_scalar_prefetch=0,
            grid=(B, n_s),                                 # reduction axis last
            in_specs=[
                pl.BlockSpec((1, C, ts), lambda b, s: (b, 0, s)),
                pl.BlockSpec((1, 1, ts), lambda b, s: (b, 0, s)),
            ],
            out_specs=pl.BlockSpec((1, 3, C), lambda b, s: (b, 0, 0)),
        ),
        compiler_params=pltpu.CompilerParams(
            dimension_semantics=("parallel", "arbitrary")),
    )(pred_r, labels_r)

    # Tiny per-(B,C) epilogue: done in plain XLA on (B,3,16) values.
    inter = stats[:, 0, :] + smooth                        # (B, C)
    union = stats[:, 1, :] + stats[:, 2, :] + smooth       # (B, C)
    score = 1.0 - 2.0 * inter / union                      # (B, C)
    return jnp.mean(score)


def _reference_loss(pred, true, smooth=SMOOTH):
    # Pure-JAX reference of the same forward pass (for sanity; no torch).
    B, C = pred.shape[0], pred.shape[1]
    onehot = jax.nn.one_hot(true, N_CLASSES, dtype=jnp.float32)      # (B,D,H,W,16)
    onehot = jnp.moveaxis(onehot, -1, 1)                             # (B,16,D,H,W)
    sm = jax.nn.softmax(pred.astype(jnp.float32), axis=1)
    sm = sm.reshape(B, C, -1)
    t = onehot.reshape(B, C, -1)
    inter = jnp.sum(sm * t, axis=2) + smooth
    union = jnp.sum(sm, axis=2) + jnp.sum(t, axis=2) + smooth
    return jnp.mean(1.0 - 2.0 * inter / union)


if __name__ == "__main__":
    # Deterministic "parameters" of the module: weight list (len 16), alpha.
    weight = [float(i + 1) for i in range(N_CLASSES)]   # unused by forward
    alpha = 0.5                                         # unused by forward

    key = jax.random.PRNGKey(0)
    k_pred, k_true, k_pred2, k_true2 = jax.random.split(key, 4)

    # Case 1: S = D*H*W = 256, single spatial tile.
    B, C, D, H, W = 2, N_CLASSES, 4, 8, 8
    pred = jax.random.normal(k_pred, (B, C, D, H, W), dtype=jnp.float32)
    true = jax.random.randint(k_true, (B, D, H, W), 0, N_CLASSES, dtype=jnp.int32)
    loss = jax.block_until_ready(combo_loss_wbce_dice(pred, true, weight, alpha))
    ref = jax.block_until_ready(_reference_loss(pred, true))
    # approx=True reciprocal in the kernel -> relaxed from bit-level parity.
    np.testing.assert_allclose(np.asarray(loss), np.asarray(ref),
                               rtol=5e-3, atol=5e-3)

    # Case 2: S = 300 (not a multiple of 128) with a forced tiny tile to
    # exercise multi-tile accumulation and padded-lane masking.
    B2, D2, H2, W2 = 2, 5, 6, 10
    pred2 = jax.random.normal(k_pred2, (B2, C, D2, H2, W2), dtype=jnp.float32)
    true2 = jax.random.randint(k_true2, (B2, D2, H2, W2), 0, N_CLASSES,
                               dtype=jnp.int32)
    loss2 = jax.block_until_ready(
        combo_loss_wbce_dice(pred2, true2, weight, alpha, max_tile_s=128))
    ref2 = jax.block_until_ready(_reference_loss(pred2, true2))
    np.testing.assert_allclose(np.asarray(loss2), np.asarray(ref2),
                               rtol=5e-3, atol=5e-3)

    print("KERNEL_OK")
</pallas_src>

<mosaic_0001>
module attributes {stable_mosaic.version = 11 : i64} {
  func.func @_dice_stats_kernel(%arg0: i32, %arg1: i32, %arg2: memref<1x16x256xf32, #tpu.memory_space<vmem>>, %arg3: memref<1x1x256xi32, #tpu.memory_space<vmem>>, %arg4: memref<1x3x16xf32, #tpu.memory_space<vmem>>) attributes {dimension_semantics = [#tpu.dimension_semantics<parallel>, #tpu.dimension_semantics<arbitrary>], iteration_bounds = array<i64: 2, 1>, scalar_prefetch = 0 : i64, scratch_operands = 0 : i64, tpu.core_type = #tpu.core_type<tc>, window_params = [{transform_indices = @transform_0, window_bounds = array<i64: 1, 16, 256>}, {transform_indices = @transform_1, window_bounds = array<i64: 1, 1, 256>}, {transform_indices = @transform_2, window_bounds = array<i64: 1, 3, 16>}]} {
    %c0_i32 = arith.constant 0 : i32
    %0 = arith.cmpi eq, %arg1, %c0_i32 : i32
    %1 = arith.extui %0 : i1 to i32
    %c0_i32_0 = arith.constant 0 : i32
    %2 = arith.cmpi ne, %1, %c0_i32_0 : i32
    scf.if %2 {
      %cst_27 = arith.constant 0.000000e+00 : f32
      %45 = vector.broadcast %cst_27 : f32 to vector<1x3x16xf32>
      %c0_28 = arith.constant 0 : index
      %c0_29 = arith.constant 0 : index
      %c0_30 = arith.constant 0 : index
      %46 = vector.load %arg4[%c0_28, %c0_29, %c0_30] : memref<1x3x16xf32, #tpu.memory_space<vmem>>, vector<1x3x16xf32>
      tpu.vector_store %arg4[%c0_28, %c0_29, %c0_30], %45 {strides = array<i32>} : memref<1x3x16xf32, #tpu.memory_space<vmem>>, vector<1x3x16xf32>,
    } else {
    }
    %c0 = arith.constant 0 : index
    %c0_1 = arith.constant 0 : index
    %c0_2 = arith.constant 0 : index
    %3 = vector.load %arg2[%c0, %c0_1, %c0_2] : memref<1x16x256xf32, #tpu.memory_space<vmem>>, vector<1x16x256xf32>
    %4 = vector.shape_cast %3 : vector<1x16x256xf32> to vector<16x256xf32>
    %cst = arith.constant dense<0xFF800000> : vector<256xf32>
    %5 = vector.multi_reduction <maximumf>, %4, %cst [0] : vector<16x256xf32> to vector<256xf32>
    %6 = vector.shape_cast %5 : vector<256xf32> to vector<1x256xf32>
    %7 = vector.broadcast %6 : vector<1x256xf32> to vector<16x256xf32>
    %8 = arith.subf %4, %7 : vector<16x256xf32>
    %9 = math.exp %8 : vector<16x256xf32>
    %cst_3 = arith.constant dense<0.000000e+00> : vector<256xf32>
    %10 = vector.multi_reduction <add>, %9, %cst_3 [0] : vector<16x256xf32> to vector<256xf32>
    %11 = vector.shape_cast %10 : vector<256xf32> to vector<1x256xf32>
    %12 = tpu.reciprocal %11 {approx = true} : vector<1x256xf32> -> vector<1x256xf32>
    %13 = vector.broadcast %12 : vector<1x256xf32> to vector<16x256xf32>
    %14 = arith.mulf %9, %13 : vector<16x256xf32>
    %c0_4 = arith.constant 0 : index
    %c0_5 = arith.constant 0 : index
    %c0_6 = arith.constant 0 : index
    %15 = vector.load %arg3[%c0_4, %c0_5, %c0_6] : memref<1x1x256xi32, #tpu.memory_space<vmem>>, vector<1x1x256xi32>
    %16 = vector.shape_cast %15 : vector<1x1x256xi32> to vector<1x256xi32>
    %17 = tpu.iota {dimensions = array<i32: 0>} : vector<16x256xi32>
    %18 = vector.broadcast %16 : vector<1x256xi32> to vector<16x256xi32>
    %19 = arith.cmpi eq, %18, %17 : vector<16x256xi32>
    %cst_7 = arith.constant 0.000000e+00 : f32
    %20 = vector.broadcast %cst_7 : f32 to vector<16x256xf32>
    %21 = arith.select %19, %14, %20 : vector<16x256xi1>, vector<16x256xf32>
    %cst_8 = arith.constant dense<0.000000e+00> : vector<16xf32>
    %22 = vector.multi_reduction <add>, %21, %cst_8 [1] : vector<16x256xf32> to vector<16xf32>
    %cst_9 = arith.constant dense<0.000000e+00> : vector<16xf32>
    %23 = vector.multi_reduction <add>, %14, %cst_9 [1] : vector<16x256xf32> to vector<16xf32>
    %24 = arith.extui %19 : vector<16x256xi1> to vector<16x256xi32>
    %25 = arith.sitofp %24 : vector<16x256xi32> to vector<16x256xf32>
    %cst_10 = arith.constant dense<0.000000e+00> : vector<16xf32>
    %26 = vector.multi_reduction <add>, %25, %cst_10 [1] : vector<16x256xf32> to vector<16xf32>
    %c0_11 = arith.constant 0 : index
    %c0_12 = arith.constant 0 : index
    %c0_13 = arith.constant 0 : index
    %27 = vector.load %arg4[%c0_11, %c0_12, %c0_13] : memref<1x3x16xf32, #tpu.memory_space<vmem>>, vector<1x1x16xf32>
    %28 = vector.shape_cast %27 : vector<1x1x16xf32> to vector<16xf32>
    %29 = arith.addf %28, %22 : vector<16xf32>
    %c0_14 = arith.constant 0 : index
    %c0_15 = arith.constant 0 : index
    %c0_16 = arith.constant 0 : index
    %30 = vector.load %arg4[%c0_14, %c0_15, %c0_16] : memref<1x3x16xf32, #tpu.memory_space<vmem>>, vector<1x1x16xf32>
    %31 = vector.shape_cast %30 : vector<1x1x16xf32> to vector<16xf32>
    %32 = vector.shape_cast %29 : vector<16xf32> to vector<1x1x16xf32>
    tpu.vector_store %arg4[%c0_14, %c0_15, %c0_16], %32 {strides = array<i32>} : memref<1x3x16xf32, #tpu.memory_space<vmem>>, vector<1x1x16xf32>,
    %c0_17 = arith.constant 0 : index
    %c1 = arith.constant 1 : index
    %c0_18 = arith.constant 0 : index
    %33 = vector.load %arg4[%c0_17, %c1, %c0_18] : memref<1x3x16xf32, #tpu.memory_space<vmem>>, vector<1x1x16xf32>
    %34 = vector.shape_cast %33 : vector<1x1x16xf32> to vector<16xf32>
    %35 = arith.addf %34, %23 : vector<16xf32>
    %c0_19 = arith.constant 0 : index
    %c1_20 = arith.constant 1 : index
    %c0_21 = arith.constant 0 : index
    %36 = vector.load %arg4[%c0_19, %c1_20, %c0_21] : memref<1x3x16xf32, #tpu.memory_space<vmem>>, vector<1x1x16xf32>
    %37 = vector.shape_cast %36 : vector<1x1x16xf32> to vector<16xf32>
    %38 = vector.shape_cast %35 : vector<16xf32> to vector<1x1x16xf32>
    tpu.vector_store %arg4[%c0_19, %c1_20, %c0_21], %38 {strides = array<i32>} : memref<1x3x16xf32, #tpu.memory_space<vmem>>, vector<1x1x16xf32>,
    %c0_22 = arith.constant 0 : index
    %c2 = arith.constant 2 : index
    %c0_23 = arith.constant 0 : index
    %39 = vector.load %arg4[%c0_22, %c2, %c0_23] : memref<1x3x16xf32, #tpu.memory_space<vmem>>, vector<1x1x16xf32>
    %40 = vector.shape_cast %39 : vector<1x1x16xf32> to vector<16xf32>
    %41 = arith.addf %40, %26 : vector<16xf32>
    %c0_24 = arith.constant 0 : index
    %c2_25 = arith.constant 2 : index
    %c0_26 = arith.constant 0 : index
    %42 = vector.load %arg4[%c0_24, %c2_25, %c0_26] : memref<1x3x16xf32, #tpu.memory_space<vmem>>, vector<1x1x16xf32>
    %43 = vector.shape_cast %42 : vector<1x1x16xf32> to vector<16xf32>
    %44 = vector.shape_cast %41 : vector<16xf32> to vector<1x1x16xf32>
    tpu.vector_store %arg4[%c0_24, %c2_25, %c0_26], %44 {strides = array<i32>} : memref<1x3x16xf32, #tpu.memory_space<vmem>>, vector<1x1x16xf32>,
    return
  }
  func.func @transform_0(%arg0: i32, %arg1: i32) -> (i32, i32, i32) {
    %c0_i32 = arith.constant 0 : i32
    %c0_i32_0 = arith.constant 0 : i32
    return %arg0, %c0_i32, %arg1 : i32, i32, i32
  }
  func.func @transform_1(%arg0: i32, %arg1: i32) -> (i32, i32, i32) {
    %c0_i32 = arith.constant 0 : i32
    %c0_i32_0 = arith.constant 0 : i32
    return %arg0, %c0_i32, %arg1 : i32, i32, i32
  }
  func.func @transform_2(%arg0: i32, %arg1: i32) -> (i32, i32, i32) {
    %c0_i32 = arith.constant 0 : i32
    %c0_i32_0 = arith.constant 0 : i32
    %c0_i32_1 = arith.constant 0 : i32
    return %arg0, %c0_i32, %c0_i32_0 : i32, i32, i32
  }
}

</mosaic_0001>

<llo_original>
// kernel: tpu_custom_call.1
$region0: #{tpu_custom_call.1}
  #allocation0 [shape = 'u32[]', space=smem, size = 0x4, offset = 0x4, fixed_abs, tag = 'smem constant byte address 0x4 - core index']
  #allocation1 [shape = 'u32[144,128]{1,0:T(1,128)}', space=vmem, size = 0x12000, scoped, tag = 'internal scratch']
  %s0 = inlined_call_operand.hbm [shape: f32[2,16,256], index: 0, kind: input, shape index: {}]
  %s1 = inlined_call_operand.hbm [shape: s32[2,1,256], index: 1, kind: input, shape index: {}]
  %s2 = inlined_call_operand.vmem [shape: f32[2,3,16], index: 2, kind: output, shape index: {}]
  %s3 = sld [smem:[#allocation0]]
  $region53: #{tpu_custom_call.1} parent=0
    _
  %s5 = ssub.s32 1, %s3
  %s6 = scalar_select 0, %s5, %s3
  $region1: #{tpu_custom_call.1} parent=0
    #allocation2 [shape = 'u8[32768]{0}', space=vmem, size = 0x8000, scoped, tag = 'input window, operand 0']
    #allocation3 [shape = 's32[2]{0}', space=sflag, size = 0x8, scoped, tag = 'scoped memory for tpu_custom_call.1']
    #allocation4 [shape = 'u8[2048]{0}', space=vmem, size = 0x800, scoped, tag = 'input window, operand 1']
    #allocation5 [shape = 's32[2]{0}', space=sflag, size = 0x8, scoped, tag = 'scoped memory for tpu_custom_call.1']
    %7 = vsyncpa [#allocation3], 0
    %s8 = scalar_lea.sflag [#allocation3], 1
    %9 = vsyncpa %s8, 0
    %10 = vsyncpa [#allocation5], 0
    %s11 = scalar_lea.sflag [#allocation5], 1
    %12 = vsyncpa %s11, 0
    loop: start=0, step=1, limit=4
    $region2: #{tpu_custom_call.1} parent=1 // loop_pre_header
      _
    $region3: #{tpu_custom_call.1} parent=1 // loop_header
      %s14 = sphi 0, %s18
      %p15 = scmp.ge.s32.totalorder %s14, 4
      %s21 = sphi 0, %s33
      %s22 = sphi 0, %s29
      %s23 = sphi 0, %s21
      %s24 = sphi 0, %s22
      %s25 = sphi 0, %s23
      %s26 = sphi 0, %s24
      %s38 = sphi 0, %s40
      %s41 = sphi 0, %s38
      %s42 = sphi 0, %s41
      %s58 = sphi 0, %s42
      %s66 = sphi 0, %s68
      %s69 = sphi 0, %s66
      %s70 = sphi 0, %s69
      %s86 = sphi 0, %s70
      %s92 = sphi 0, %s94
      %s95 = sphi 0, %s92
      %s96 = sphi 0, %s95
      %s112 = sphi 0, %s96
    $region4: #{tpu_custom_call.1} parent=1 // loop_header_branch
      %17 = sbr.rel (%p15) target = $region8
    $region5: #{tpu_custom_call.1} parent=1 // loop_body
      %s19 = ssub.s32 %s14, 1
      %s20 = ssub.s32 %s14, 2
      %s27 = sadd.s32 1, %s22
      %p28 = scmp.ge.s32.totalorder %s27, 1
      %s29 = scalar_select %p28, 0, %s27
      %s30 = sadd.s32 1, %s21
      %s31 = scalar_select %p28, %s30, %s21
      %p32 = scmp.ge.s32.totalorder %s31, 2
      %s33 = scalar_select %p32, 0, %s31
      %s34 = ssub.s32 %s21, %s33
      %s35 = ssub.s32 %s22, %s29
      %s36 = sor.u32 %s34, %s35
      %p37 = scmp.eq.s32.totalorder %s36, 0
      %s39 = sadd.s32 %s38, 1
      %s40 = scalar_select %p37, %s38, %s39
      %p43 = pneg %p37
      %p44 = scmp.eq.s32.totalorder %s14, 1
      %p45 = por %p43, %p44
      %p46 = scmp.ne.s32.totalorder %s38, %s41
      %p47 = scmp.eq.s32.totalorder %s14, 0
      %p48 = por %p46, %p47
      %p49 = scmp.ne.s32.totalorder %s38, %s41
      %p50 = scmp.eq.s32.totalorder %s19, 1
      %p51 = por %p49, %p50
      %p52 = scmp.ne.s32.totalorder %s41, %s42
      %p53 = scmp.eq.s32.totalorder %s19, 0
      %p54 = por %p52, %p53
      %p55 = scmp.ne.s32.totalorder %s41, %s42
      %p56 = scmp.eq.s32.totalorder %s20, 1
      %p57 = por %p55, %p56
      %p59 = scmp.ne.s32.totalorder %s42, %s58
      %p60 = scmp.eq.s32.totalorder %s20, 0
      %p61 = por %p59, %p60
      %s62 = ssub.s32 %s21, %s33
      %s63 = ssub.s32 %s22, %s29
      %s64 = sor.u32 %s62, %s63
      %p65 = scmp.eq.s32.totalorder %s64, 0
      %s67 = sadd.s32 %s66, 1
      %s68 = scalar_select %p65, %s66, %s67
      %p71 = pneg %p65
      %p72 = scmp.eq.s32.totalorder %s14, 1
      %p73 = por %p71, %p72
      %p74 = scmp.ne.s32.totalorder %s66, %s69
      %p75 = scmp.eq.s32.totalorder %s14, 0
      %p76 = por %p74, %p75
      %p77 = scmp.ne.s32.totalorder %s66, %s69
      %p78 = scmp.eq.s32.totalorder %s19, 1
      %p79 = por %p77, %p78
      %p80 = scmp.ne.s32.totalorder %s69, %s70
      %p81 = scmp.eq.s32.totalorder %s19, 0
      %p82 = por %p80, %p81
      %p83 = scmp.ne.s32.totalorder %s69, %s70
      %p84 = scmp.eq.s32.totalorder %s20, 1
      %p85 = por %p83, %p84
      %p87 = scmp.ne.s32.totalorder %s70, %s86
      %p88 = scmp.eq.s32.totalorder %s20, 0
      %p89 = por %p87, %p88
      %s90 = ssub.s32 %s21, %s33
      %p91 = scmp.eq.s32.totalorder %s90, 0
      %s93 = sadd.s32 %s92, 1
      %s94 = scalar_select %p91, %s92, %s93
      %p97 = pneg %p91
      %p98 = scmp.eq.s32.totalorder %s14, 1
      %p99 = por %p97, %p98
      %p100 = scmp.ne.s32.totalorder %s92, %s95
      %p101 = scmp.eq.s32.totalorder %s14, 0
      %p102 = por %p100, %p101
      %p103 = scmp.ne.s32.totalorder %s92, %s95
      %p104 = scmp.eq.s32.totalorder %s19, 1
      %p105 = por %p103, %p104
      %p106 = scmp.ne.s32.totalorder %s95, %s96
      %p107 = scmp.eq.s32.totalorder %s19, 0
      %p108 = por %p106, %p107
      %p109 = scmp.ne.s32.totalorder %s95, %s96
      %p110 = scmp.eq.s32.totalorder %s20, 1
      %p111 = por %p109, %p110
      %p113 = scmp.ne.s32.totalorder %s96, %s112
      %p114 = scmp.eq.s32.totalorder %s20, 0
      %p115 = por %p113, %p114
      %p116 = scmp.le.s32.totalorder 1, %s14
      %p117 = scmp.lt.s32.totalorder %s14, 3
      %p118 = pnand %p116, %p117
      %p119 = pneg %p118
      // Predicated region
      $region9: #{tpu_custom_call.1} parent=5 // pred_check
        _
      $region10: #{tpu_custom_call.1} parent=5 // pred_check_branch
        %121 = sbr.rel (%p118) target = $region12
      $region11: #{tpu_custom_call.1} parent=5 // pred_region
        %s122 = ssub.s32 %s14, 1
      $region12: #{tpu_custom_call.1} parent=5 // pred_fallthru
        _
      %p123 = scmp.lt.s32.totalorder %s14, 2
      // Predicated region
      $region13: #{tpu_custom_call.1} parent=5 // pred_check
        %p124 = pneg %p123
      $region14: #{tpu_custom_call.1} parent=5 // pred_check_branch
        %126 = sbr.rel (%p124) target = $region16
      $region15: #{tpu_custom_call.1} parent=5 // pred_region
        // Predicated region
        $region17: #{tpu_custom_call.1} parent=15 // pred_check
          %p127 = pneg %p48
        $region18: #{tpu_custom_call.1} parent=15 // pred_check_branch
          %129 = sbr.rel (%p127) target = $region20
        $region19: #{tpu_custom_call.1} parent=15 // pred_region
          %s130 = sand.u32 %s38, 1
          %s131 = scalar_lea.sflag [#allocation3], %s130
          %s132 = sand.u32 %s38, 1
          %s133 = smul.addr %s132, 32
          %s134 = scalar_lea.vmem [#allocation2], %s133
          %s135 = smul.u32 2, %s22
          %s137 = ssub.s32 512, 512
          %138 = vsyncadd %s131, %s137
          %s139 = smul.addr %s21, 4
          %s140 = sadd.s32 %s135, %s139
          %s141 = smul.addr %s140, 128
          %s142 = scalar_lea.hbm %s0, %s141
          %s143 = sshll.u32 %s134, 4
          %s144 = int_to_ptr.vmem [resolvable:$true] %s143
          %149 = dma.hbm_to_vmem [thread:$0]  %s142, 512, %s144, %s131, 256, 256, 16
        $region20: #{tpu_custom_call.1} parent=15 // pred_fallthru
          _
        // Predicated region
        $region21: #{tpu_custom_call.1} parent=15 // pred_check
          %p150 = pneg %p76
        $region22: #{tpu_custom_call.1} parent=15 // pred_check_branch
          %152 = sbr.rel (%p150) target = $region24
        $region23: #{tpu_custom_call.1} parent=15 // pred_region
          %s153 = sand.u32 %s66, 1
          %s154 = scalar_lea.sflag [#allocation5], %s153
          %s155 = sand.u32 %s66, 1
          %s156 = smul.addr %s155, 2
          %s157 = scalar_lea.vmem [#allocation4], %s156
          %s158 = smul.u32 2, %s22
          %s160 = ssub.s32 32, 32
          %161 = vsyncadd %s154, %s160
          %s162 = smul.addr %s21, 2
          %s163 = sadd.s32 %s158, %s162
          %s164 = smul.addr %s163, 16
          %s165 = scalar_lea.hbm %s1, %s164
          %s167 = sshll.u32 %s157, 4
          %s168 = int_to_ptr.vmem [resolvable:$true] %s167
          %170 = dma.hbm_to_vmem [thread:$0]  %s165, 32, %s168, %s154
        $region24: #{tpu_custom_call.1} parent=15 // pred_fallthru
          _
      $region16: #{tpu_custom_call.1} parent=5 // pred_fallthru
        _
      %p171 = scmp.le.s32.totalorder 1, %s14
      %p172 = scmp.lt.s32.totalorder %s14, 3
      %p173 = pnand %p171, %p172
      %p174 = pneg %p173
      // Predicated region
      $region25: #{tpu_custom_call.1} parent=5 // pred_check
        _
      $region26: #{tpu_custom_call.1} parent=5 // pred_check_branch
        %176 = sbr.rel (%p173) target = $region28
      $region27: #{tpu_custom_call.1} parent=5 // pred_region
        %s177 = ssub.s32 %s14, 1
        %s178 = sand.u32 %s41, 1
        %s179 = scalar_lea.sflag [#allocation3], %s178
        %s180 = sand.u32 %s41, 1
        %s181 = smul.addr %s180, 32
        %s182 = scalar_lea.vmem [#allocation2], %s181
        // Predicated region
        $region29: #{tpu_custom_call.1} parent=27 // pred_check
          %p183 = pneg %p54
        $region30: #{tpu_custom_call.1} parent=27 // pred_check_branch
          %185 = sbr.rel (%p183) target = $region32
        $region31: #{tpu_custom_call.1} parent=27 // pred_region
          %186 = dma.done %s179, 512
        $region32: #{tpu_custom_call.1} parent=27 // pred_fallthru
          _
        %s187 = sand.u32 %s69, 1
        %s188 = scalar_lea.sflag [#allocation5], %s187
        %s189 = sand.u32 %s69, 1
        %s190 = smul.addr %s189, 2
        %s191 = scalar_lea.vmem [#allocation4], %s190
        // Predicated region
        $region33: #{tpu_custom_call.1} parent=27 // pred_check
          %p192 = pneg %p82
        $region34: #{tpu_custom_call.1} parent=27 // pred_check_branch
          %194 = sbr.rel (%p192) target = $region36
        $region35: #{tpu_custom_call.1} parent=27 // pred_region
          %195 = dma.done %s188, 32
        $region36: #{tpu_custom_call.1} parent=27 // pred_fallthru
          _
        %s196 = sand.u32 %s41, 1
        %s197 = scalar_lea.sflag [#allocation3], %s196
        %s198 = sand.u32 %s41, 1
        %s199 = smul.addr %s198, 32
        %s200 = scalar_lea.vmem [#allocation2], %s199
        %p201 = pneg %p54
        %p202 = pneg %p51
        %s203 = sand.u32 %s69, 1
        %s204 = scalar_lea.sflag [#allocation5], %s203
        %s205 = sand.u32 %s69, 1
        %s206 = smul.addr %s205, 2
        %s207 = scalar_lea.vmem [#allocation4], %s206
        %p208 = pneg %p82
        %p209 = pneg %p79
        %p210 = pneg %p108
        %p211 = pneg %p105
        %p212 = scmp.lt.s32.totalorder %s23, 1
        %s213 = scalar_select %p212, %s23, 1
        %s214 = smul.addr %s213, 4
        %s215 = scalar_lea.vmem %s2, %s214
        %s216 = smul.u32 2, %s24
        %s217 = smul.u32 2, %s24
        %p218 = scmp.lt.s32.totalorder %s23, 1
        %s219 = scalar_select %p218, %s23, 1
        %s220 = smul.addr %s219, 4
        %s221 = scalar_lea.vmem %s2, %s220
        %p222 = scmp.eq.s32.totalorder %s24, 0
        // Predicated region
        $region37: #{tpu_custom_call.1} parent=27 // pred_check
          %p223 = pneg %p222
        $region38: #{tpu_custom_call.1} parent=27 // pred_check_branch
          %225 = sbr.rel (%p223) target = $region40
        $region39: #{tpu_custom_call.1} parent=27 // pred_region
          %vm226 = vcmask 124928
          %227 = vst.msk [vmem:[%s221] sm:$0x7] %vm226, 0.0
        $region40: #{tpu_custom_call.1} parent=27 // pred_fallthru
          _
        %v228 = vld [vmem:[%s182] sm:$0xff]
        %v229 = vld [vmem:[%s182 + $0x8] sm:$0xff]
        %v230 = vld [vmem:[%s182 + $0x10] sm:$0xff]
        %v231 = vld [vmem:[%s182 + $0x18] sm:$0xff]
        %v232 = vmax.f32 %v228, %v230
        %v233 = vrot.slane %v232, 4
        %v234 = vmax.f32 %v232, %v233
        %v235 = vrot.slane %v234, 2
        %v236 = vmax.f32 %v234, %v235
        %v237 = vrot.slane %v236, 1
        %v238 = vmax.f32 %v236, %v237
        %v239 = vmax.f32 %v229, %v231
        %v240 = vrot.slane %v239, 4
        %v241 = vmax.f32 %v239, %v240
        %v242 = vrot.slane %v241, 2
        %v243 = vmax.f32 %v241, %v242
        %v244 = vrot.slane %v243, 1
        %v245 = vmax.f32 %v243, %v244
        %v246 = vsub.f32 %v228, %v238
        %v247 = vsub.f32 %v229, %v245
        %v248 = vsub.f32 %v230, %v238
        %v249 = vsub.f32 %v231, %v245
        %v250 = vmul.f32 %v246, 1.442695
        %v251 = vpow.pop %v250
        %v252 = vmul.f32 %v247, 1.442695
        %v253 = vpow.pop %v252
        %v254 = vmul.f32 %v248, 1.442695
        %v255 = vpow.pop %v254
        %v256 = vmul.f32 %v249, 1.442695
        %v257 = vpow.pop %v256
        %v258 = vadd.f32 %v251, %v255
        %v259 = vrot.slane %v258, 4
        %v260 = vadd.f32 %v258, %v259
        %v261 = vrot.slane %v260, 2
        %v262 = vadd.f32 %v260, %v261
        %v263 = vrot.slane %v262, 1
        %v264 = vadd.f32 %v262, %v263
        %v265 = vadd.f32 %v253, %v257
        %v266 = vrot.slane %v265, 4
        %v267 = vadd.f32 %v265, %v266
        %v268 = vrot.slane %v267, 2
        %v269 = vadd.f32 %v267, %v268
        %v270 = vrot.slane %v269, 1
        %v271 = vadd.f32 %v269, %v270
        %v272 = vrcp.pop %v264
        %v273 = vrcp.pop %v271
        %v274 = vmul.f32 %v251, %v272
        %v275 = vmul.f32 %v253, %v273
        %v276 = vmul.f32 %v255, %v272
        %v277 = vmul.f32 %v257, %v273
        %v278 = vld [vmem:[%s191] sm:$0x3]
        %v279 = vlaneseq
        %v280 = vshrl.u32 %v279, 7
        %v281 = vadd.s32 %v280, 8
        %v282 = vlaneseq
        %v283 = vshrl.u32 %v282, 7
        %v284 = vsub.s32 0, %v283
        %v285 = vrot.slane %v278, %v284
        %v286 = vlaneseq
        %v287 = vshrl.u32 %v286, 7
        %v288 = vsub.s32 1, %v287
        %v289 = vrot.slane %v278, %v288
        %vm290 = vcmp.eq.s32.totalorder %v285, %v280
        %vm291 = vcmp.eq.s32.totalorder %v289, %v280
        %vm292 = vcmp.eq.s32.totalorder %v285, %v281
        %vm293 = vcmp.eq.s32.totalorder %v289, %v281
        %v294 = vsel %vm290, %v274, 0.0
        %v295 = vsel %vm291, %v275, 0.0
        %v296 = vsel %vm292, %v276, 0.0
        %v297 = vsel %vm293, %v277, 0.0
        %v298 = vadd.f32 %v294, %v295
        %299 = vadd.xlane.f32.xlu0 %v298
        %v300 = vpop.xlane.xlu0 %299
        %v301 = vadd.f32 %v296, %v297
        %302 = vadd.xlane.f32.xlu0 %v301
        %v303 = vpop.xlane.xlu0 %302
        %v304 = vadd.f32 %v274, %v275
        %305 = vadd.xlane.f32.xlu0 %v304
        %v306 = vpop.xlane.xlu0 %305
        %v307 = vadd.f32 %v276, %v277
        %308 = vadd.xlane.f32.xlu0 %v307
        %v309 = vpop.xlane.xlu0 %308
        %v310 = vsel %vm290, 1, 0
        %v311 = vsel %vm291, 1, 0
        %v312 = vsel %vm292, 1, 0
        %v313 = vsel %vm293, 1, 0
        %v314 = vcvt.s32.f32 %v310
        %v315 = vcvt.s32.f32 %v311
        %v316 = vcvt.s32.f32 %v312
        %v317 = vcvt.s32.f32 %v313
        %v318 = vadd.f32 %v314, %v315
        %319 = vadd.xlane.f32.xlu0 %v318
        %v320 = vpop.xlane.xlu0 %319
        %v321 = vadd.f32 %v316, %v317
        %322 = vadd.xlane.f32.xlu0 %v321
        %v323 = vpop.xlane.xlu0 %322
        %v324 = vld [vmem:[%s221] sm:$0x1]
        %v327 = vlaneseq
        %v328 = vand.u32 %v327, 127
        %v329 = vlaneseq
        %v330 = vshrl.u32 %v329, 7
        %v331 = vsub.s32 %v328, %v330
        %v332 = vrot.slane %v300, %v331
        %v333 = vadd.s32 %v328, 4294967288
        %v334 = vlaneseq
        %v335 = vshrl.u32 %v334, 7
        %v336 = vsub.s32 %v333, %v335
        %v337 = vrot.slane %v303, %v336
        %vm338 = vcmask 130112
        %v339 = vsel %vm338, %v337, %v332
        %v341 = vadd.f32 %v324, %v339
        %vm342 = vcmask 122880
        %343 = vst.msk [vmem:[%s221] sm:$0x1] %vm342, %v341
        %v344 = vld [vmem:[%s221 + $0x1] sm:$0x1]
        %v347 = vlaneseq
        %v348 = vshrl.u32 %v347, 7
        %v349 = vsub.s32 %v328, %v348
        %v350 = vrot.slane %v306, %v349
        %v351 = vlaneseq
        %v352 = vshrl.u32 %v351, 7
        %v353 = vsub.s32 %v333, %v352
        %v354 = vrot.slane %v309, %v353
        %v355 = vsel %vm338, %v354, %v350
        %v357 = vadd.f32 %v344, %v355
        %358 = vst.msk [vmem:[%s221 + $0x1] sm:$0x1] %vm342, %v357
        %v359 = vld [vmem:[%s221 + $0x2] sm:$0x1]
        %v362 = vlaneseq
        %v363 = vshrl.u32 %v362, 7
        %v364 = vsub.s32 %v328, %v363
        %v365 = vrot.slane %v320, %v364
        %v366 = vlaneseq
        %v367 = vshrl.u32 %v366, 7
        %v368 = vsub.s32 %v333, %v367
        %v369 = vrot.slane %v323, %v368
        %v370 = vsel %vm338, %v369, %v365
        %v372 = vadd.f32 %v359, %v370
        %373 = vst.msk [vmem:[%s221 + $0x2] sm:$0x1] %vm342, %v372
        %p374 = scmp.lt.s32.totalorder %s23, 1
        %s375 = scalar_select %p374, %s23, 1
        %s376 = smul.addr %s375, 4
        %s377 = scalar_lea.vmem %s2, %s376
        // Predicated region
        $region41: #{tpu_custom_call.1} parent=27 // pred_check
          %p378 = pneg %p105
        $region42: #{tpu_custom_call.1} parent=27 // pred_check_branch
          %380 = sbr.rel (%p378) target = $region44
        $region43: #{tpu_custom_call.1} parent=27 // pred_region
          _
        $region44: #{tpu_custom_call.1} parent=27 // pred_fallthru
          _
      $region28: #{tpu_custom_call.1} parent=5 // pred_fallthru
        _
      %p381 = scmp.le.s32.totalorder 2, %s14
      // Predicated region
      $region45: #{tpu_custom_call.1} parent=5 // pred_check
        %p382 = pneg %p381
      $region46: #{tpu_custom_call.1} parent=5 // pred_check_branch
        %384 = sbr.rel (%p382) target = $region48
      $region47: #{tpu_custom_call.1} parent=5 // pred_region
        %s385 = ssub.s32 %s14, 2
        // Predicated region
        $region49: #{tpu_custom_call.1} parent=47 // pred_check
          %p386 = pneg %p111
        $region50: #{tpu_custom_call.1} parent=47 // pred_check_branch
          %388 = sbr.rel (%p386) target = $region52
        $region51: #{tpu_custom_call.1} parent=47 // pred_region
          %p389 = scmp.lt.s32.totalorder %s25, 1
          %s390 = scalar_select %p389, %s25, 1
          %s391 = smul.addr %s390, 4
          %s392 = scalar_lea.vmem %s2, %s391
        $region52: #{tpu_custom_call.1} parent=47 // pred_fallthru
          _
      $region48: #{tpu_custom_call.1} parent=5 // pred_fallthru
        _
    $region6: #{tpu_custom_call.1} parent=1 // loop_footer
      %s18 = sadd.s32 1, %s14
    $region7: #{tpu_custom_call.1} parent=1 // loop_footer_branch
      %13 = sbr.rel target = $region3
    $region8: #{tpu_custom_call.1} parent=1 // loop_exit
      _
    %393 = vsyncpa [#allocation3], 1
    %s394 = scalar_lea.sflag [#allocation3], 1
    %395 = vsyncpa %s394, 1
    %396 = vsyncpa [#allocation5], 1
    %s397 = scalar_lea.sflag [#allocation5], 1
    %398 = vsyncpa %s397, 1

</llo_original>
